<compile_context>
chip_gen: v7x
topology: tpu7x:2x2x1
jax: 0.10.0
libtpu: 0.0.40
codegen_flags: <defaults>
</compile_context>

<pallas_src>
import numpy as np
import jax
import jax.numpy as jnp
from jax.experimental import pallas as pl
from jax.experimental.pallas import tpu as pltpu


# ----------------------------- DFT matrix builders ----------------------------------
def _rfft_matrices(n_time: int, n_modes: int):
    """Real (Cr, Ci) s.t. rfft(x)[f] = sum_t (Cr + i*Ci)[f, t] * x[t]."""
    t = np.arange(n_time)
    f = np.arange(n_modes)
    ang = 2.0 * np.pi * np.outer(f, t) / n_time
    return np.cos(ang).astype(np.float32), (-np.sin(ang)).astype(np.float32)


def _irfft_matrices(n_modes: int, n_out_time: int):
    """Real (Ar, Ai) s.t. irfft(X)[n] = sum_g Ar[n,g]*Re(X[g]) + Ai[n,g]*Im(X[g]),
    implicit signal length N = 2*(n_modes-1) ('backward' norm).  Only the first
    n_out_time rows are built (== the final slice in the PyTorch module)."""
    N = 2 * (n_modes - 1)
    n = np.arange(n_out_time)
    g = np.arange(n_modes)
    w = np.full((n_modes,), 2.0)
    w[0] = 1.0
    w[-1] = 1.0  # DC / Nyquist appear once in the Hermitian extension
    ang = 2.0 * np.pi * np.outer(n, g) / N
    ar = (w[None, :] / N) * np.cos(ang)
    ai = -(w[None, :] / N) * np.sin(ang)
    return ar.astype(np.float32), ai.astype(np.float32)


# --------------------------------- Pallas kernel -------------------------------------
def _freq_linear_kernel(x_ref, m_ref, b_ref, o_ref):
    # One streaming GEMM step per batch tile:
    #   f32 x tile -> bf16 cast on the VPU (free, VALU has slack) -> MXU matmul with
    #   f32 accumulation -> f32 bias add -> lane-dense f32 store.
    x = x_ref[...].astype(jnp.bfloat16)
    acc = jnp.dot(x, m_ref[...], preferred_element_type=jnp.float32)
    o_ref[...] = (acc + b_ref[...]).astype(o_ref.dtype)


# ------------------------------- tiling heuristics -----------------------------------
def _round_up(x: int, m: int) -> int:
    return (x + m - 1) // m * m


def _default_batch_tile(batch: int) -> int:
    """128-multiple batch tiles, large on every generation (kernel is HBM bound and
    per-step VMEM footprint is ~1-2 MiB).  On v7x only keep the grid >= 2 steps so
    both TensorCores get work."""
    b128 = _round_up(max(int(batch), 1), 128)
    bt = min(1024, b128)
    try:
        kind = jax.devices()[0].device_kind.lower()
    except Exception:  # pragma: no cover - defensive
        kind = ""
    if (("v7" in kind) or ("7x" in kind)) and b128 > 128:
        bt = min(bt, _round_up(pl.cdiv(b128, 2), 128))
    return bt


# ---------------------------------- factory ------------------------------------------
def make_frequency_linear(w_re, w_im, b_re, b_im, *, n_input_time_steps,
                          n_output_time_steps, batch_tile=None):
    """Fuse the complex Linear weights with the rfft/irfft matrices ONCE and return a
    jitted forward fn.  w_re/w_im: (F_out*S_out, F_in*S_in), b_re/b_im: (F_out*S_out,)
    with modes-major flattening (matches the PyTorch module's reshape order)."""
    t_in = int(n_input_time_steps)
    t_out = int(n_output_time_steps)
    f_in = t_in // 2 + 1
    f_out = (t_out // 2 + 2) if (t_out % 2) else (t_out // 2 + 1)
    s_in = w_re.shape[1] // f_in
    s_out = w_re.shape[0] // f_out
    assert w_re.shape == (f_out * s_out, f_in * s_in)
    assert b_re.shape == (f_out * s_out,)

    # ---- fold rfft -> complex linear -> irfft -> slice into one real (K, N) GEMM ----
    # (batch-independent; recomputed only when this factory is called again)
    cr, ci = _rfft_matrices(t_in, f_in)          # (F_in, T_in)
    ar, ai = _irfft_matrices(f_out, t_out)       # (T_out, F_out)
    hi = jax.lax.Precision.HIGHEST
    wr = jnp.asarray(w_re, jnp.float32).reshape(f_out, s_out, f_in, s_in)
    wi = jnp.asarray(w_im, jnp.float32).reshape(f_out, s_out, f_in, s_in)
    # Coefficients producing Re(Y) / Im(Y) directly from the real time signal:
    a_re = (jnp.einsum('gpfq,ft->gptq', wr, cr, precision=hi)
            - jnp.einsum('gpfq,ft->gptq', wi, ci, precision=hi))
    a_im = (jnp.einsum('gpfq,ft->gptq', wr, ci, precision=hi)
            + jnp.einsum('gpfq,ft->gptq', wi, cr, precision=hi))
    # Fold irfft (only the first T_out rows): map (t, s_in) -> (n, s_out).
    m4 = (jnp.einsum('ng,gptq->tqnp', ar, a_re, precision=hi)
          + jnp.einsum('ng,gptq->tqnp', ai, a_im, precision=hi))
    k = t_in * s_in
    n = t_out * s_out
    m_fused = m4.reshape(k, n)
    b_fused = (jnp.dot(ar, jnp.asarray(b_re, jnp.float32).reshape(f_out, s_out), precision=hi)
               + jnp.dot(ai, jnp.asarray(b_im, jnp.float32).reshape(f_out, s_out), precision=hi)
               ).reshape(1, n)

    # Pad only the output/lane dim N to x128 (lane-dense unmasked stores).  K stays
    # unpadded: the full-array last dim is a legal BlockSpec, halving x reads.
    n_pad = _round_up(n, 128)
    # TODO(synk): keep m_p in f32 (grid-invariant, loaded once) with a higher-precision
    # dot if tighter accuracy is ever needed for large T_in/S_in.
    m_p = jnp.zeros((k, n_pad), jnp.bfloat16).at[:, :n].set(m_fused.astype(jnp.bfloat16))
    b_p = jnp.zeros((1, n_pad), jnp.float32).at[:, :n].set(b_fused)

    def forward(x):
        # x: (B, T_in, S_in) real  ->  (B, T_out, S_out) float32
        B = x.shape[0]
        bt = int(batch_tile) if batch_tile is not None else _default_batch_tile(B)
        b_pad = _round_up(B, bt)
        x_flat = jnp.asarray(x, jnp.float32).reshape(B, k)   # contiguous reshape, no copy
        if b_pad != B:
            # only copies when B is not already a multiple of the batch tile
            x_flat = jnp.pad(x_flat, ((0, b_pad - B), (0, 0)))

        out_p = pl.pallas_call(
            _freq_linear_kernel,
            out_shape=jax.ShapeDtypeStruct((b_pad, n_pad), jnp.float32),
            grid_spec=pl.GridSpec(
                grid=(b_pad // bt,),
                in_specs=[
                    pl.BlockSpec((bt, k), lambda b: (b, 0)),      # x tile (f32, K unpadded)
                    pl.BlockSpec((k, n_pad), lambda b: (0, 0)),   # fused weights (grid-invariant)
                    pl.BlockSpec((1, n_pad), lambda b: (0, 0)),   # fused bias    (grid-invariant)
                ],
                out_specs=pl.BlockSpec((bt, n_pad), lambda b: (b, 0)),
            ),
            compiler_params=pltpu.CompilerParams(dimension_semantics=("parallel",)),
        )(x_flat, m_p, b_p)

        return out_p[:B, :n].reshape(B, t_out, s_out)

    return jax.jit(forward)


# ------------------------------------ main --------------------------------------------
if __name__ == "__main__":
    # Shapes consistent with the module; batch large enough to exercise the batch grid.
    B = 256
    n_input_time_steps = 16
    n_output_time_steps = 9          # odd -> exercises the output_fourier_modes branch
    n_input_state_variables = 4
    n_output_state_variables = 6

    f_in = n_input_time_steps // 2 + 1                        # 9
    f_out = n_output_time_steps // 2 + 2                      # 6 (odd case)

    key = jax.random.PRNGKey(0)
    kx, kwr, kwi, kbr, kbi = jax.random.split(key, 5)

    x = jax.random.normal(kx, (B, n_input_time_steps, n_input_state_variables),
                          dtype=jnp.float32)

    in_feat = f_in * n_input_state_variables
    out_feat = f_out * n_output_state_variables
    scale = 1.0 / np.sqrt(in_feat)
    w_re = jax.random.normal(kwr, (out_feat, in_feat), dtype=jnp.float32) * scale
    w_im = jax.random.normal(kwi, (out_feat, in_feat), dtype=jnp.float32) * scale
    b_re = jax.random.normal(kbr, (out_feat,), dtype=jnp.float32) * 0.1
    b_im = jax.random.normal(kbi, (out_feat,), dtype=jnp.float32) * 0.1

    freq_linear = make_frequency_linear(
        w_re, w_im, b_re, b_im,
        n_input_time_steps=n_input_time_steps,
        n_output_time_steps=n_output_time_steps)
    out = freq_linear(x)
    jax.block_until_ready(out)

    # Pure-JAX reference reproducing the PyTorch forward exactly.
    X = jnp.fft.rfft(x, axis=1)                                    # (B, F_in, S_in) c64
    Xf = X.reshape(B, in_feat)
    W = (w_re + 1j * w_im).astype(jnp.complex64)
    bc = (b_re + 1j * b_im).astype(jnp.complex64)
    Y = Xf @ W.T + bc
    Y3 = Y.reshape(B, f_out, n_output_state_variables)
    full = jnp.fft.irfft(Y3, axis=1)                               # length 2*(F_out-1)
    ref = full[:, :n_output_time_steps, :].astype(jnp.float32)

    if not np.allclose(np.asarray(out), np.asarray(ref), rtol=2e-2, atol=2e-2):
        raise AssertionError(
            f"mismatch: max abs err = {np.max(np.abs(np.asarray(out) - np.asarray(ref)))}")
    print("KERNEL_OK")
</pallas_src>

<mosaic_0001>
module attributes {stable_mosaic.version = 11 : i64} {
  func.func @_freq_linear_kernel(%arg0: i32, %arg1: memref<256x64xf32, #tpu.memory_space<vmem>>, %arg2: memref<64x128xbf16, #tpu.memory_space<vmem>>, %arg3: memref<1x128xf32, #tpu.memory_space<vmem>>, %arg4: memref<256x128xf32, #tpu.memory_space<vmem>>) attributes {dimension_semantics = [#tpu.dimension_semantics<parallel>], iteration_bounds = array<i64: 1>, scalar_prefetch = 0 : i64, scratch_operands = 0 : i64, tpu.core_type = #tpu.core_type<tc>, window_params = [{transform_indices = @transform_0, window_bounds = array<i64: 256, 64>}, {pipeline_mode = #tpu.pipeline_mode<synchronous>, transform_indices = @transform_1, window_bounds = array<i64: 64, 128>}, {pipeline_mode = #tpu.pipeline_mode<synchronous>, transform_indices = @transform_2, window_bounds = array<i64: 1, 128>}, {transform_indices = @transform_3, window_bounds = array<i64: 256, 128>}]} {
    %c0 = arith.constant 0 : index
    %c0_0 = arith.constant 0 : index
    %0 = vector.load %arg1[%c0, %c0_0] : memref<256x64xf32, #tpu.memory_space<vmem>>, vector<256x64xf32>
    %1 = arith.truncf %0 : vector<256x64xf32> to vector<256x64xbf16>
    %c0_1 = arith.constant 0 : index
    %c0_2 = arith.constant 0 : index
    %2 = vector.load %arg2[%c0_1, %c0_2] : memref<64x128xbf16, #tpu.memory_space<vmem>>, vector<64x128xbf16>
    %cst = arith.constant dense<0.000000e+00> : vector<256x128xf32>
    %3 = tpu.matmul %1, %2, %cst {dimension_numbers = #tpu.dot_dimension_numbers<[1], [0], [0], [1], [0, 0, 1, 1], [], []>} : vector<256x64xbf16>, vector<64x128xbf16>, vector<256x128xf32> -> vector<256x128xf32>
    %c0_3 = arith.constant 0 : index
    %c0_4 = arith.constant 0 : index
    %4 = vector.load %arg3[%c0_3, %c0_4] : memref<1x128xf32, #tpu.memory_space<vmem>>, vector<1x128xf32>
    %5 = vector.broadcast %4 : vector<1x128xf32> to vector<256x128xf32>
    %6 = arith.addf %3, %5 : vector<256x128xf32>
    %c0_5 = arith.constant 0 : index
    %c0_6 = arith.constant 0 : index
    %7 = vector.load %arg4[%c0_5, %c0_6] : memref<256x128xf32, #tpu.memory_space<vmem>>, vector<256x128xf32>
    tpu.vector_store %arg4[%c0_5, %c0_6], %6 {strides = array<i32>} : memref<256x128xf32, #tpu.memory_space<vmem>>, vector<256x128xf32>,
    return
  }
  func.func @transform_0(%arg0: i32) -> (i32, i32) {
    %c0_i32 = arith.constant 0 : i32
    %c0_i32_0 = arith.constant 0 : i32
    return %arg0, %c0_i32 : i32, i32
  }
  func.func @transform_1(%arg0: i32) -> (i32, i32) {
    %c0_i32 = arith.constant 0 : i32
    %c0_i32_0 = arith.constant 0 : i32
    %c0_i32_1 = arith.constant 0 : i32
    return %c0_i32, %c0_i32_0 : i32, i32
  }
  func.func @transform_2(%arg0: i32) -> (i32, i32) {
    %c0_i32 = arith.constant 0 : i32
    %c0_i32_0 = arith.constant 0 : i32
    %c0_i32_1 = arith.constant 0 : i32
    return %c0_i32, %c0_i32_0 : i32, i32
  }
  func.func @transform_3(%arg0: i32) -> (i32, i32) {
    %c0_i32 = arith.constant 0 : i32
    %c0_i32_0 = arith.constant 0 : i32
    return %arg0, %c0_i32 : i32, i32
  }
}

</mosaic_0001>

<llo_original>
// kernel: forward.1
$region0: #{forward.1}
  #allocation0 [shape = 'u32[]', space=smem, size = 0x4, offset = 0x4, fixed_abs, tag = 'smem constant byte address 0x4 - core index']
  #allocation1 [shape = 'u32[144,128]{1,0:T(1,128)}', space=vmem, size = 0x12000, scoped, tag = 'internal scratch']
  %s0 = inlined_call_operand.vmem [shape: f32[256,64], index: 0, kind: input, shape index: {}]
  %s1 = inlined_call_operand.vmem [shape: bf16[64,128], index: 1, kind: input, shape index: {}]
  %s2 = inlined_call_operand.vmem [shape: f32[1,128], index: 2, kind: input, shape index: {}]
  %s3 = inlined_call_operand.vmem [shape: f32[256,128], index: 3, kind: output, shape index: {}]
  %s4 = sld [smem:[#allocation0]]
  $region22: #{forward.1} parent=0
    _
  %s6 = ssub.s32 1, %s4
  %s7 = scalar_select 0, %s6, %s4
  // Predicated region
  $region2: #{forward.1} parent=0 // pred_check
    _
  $region3: #{forward.1} parent=0 // pred_check_branch
    %9 = sbr.rel (0) target = $region5
  $region4: #{forward.1} parent=0 // pred_region
    _
  $region5: #{forward.1} parent=0 // pred_fallthru
    _
  // Predicated region
  $region6: #{forward.1} parent=0 // pred_check
    _
  $region7: #{forward.1} parent=0 // pred_check_branch
    %11 = sbr.rel (0) target = $region9
  $region8: #{forward.1} parent=0 // pred_region
    _
  $region9: #{forward.1} parent=0 // pred_fallthru
    _
  // Predicated region
  $region10: #{forward.1} parent=0 // pred_check
    _
  $region11: #{forward.1} parent=0 // pred_check_branch
    %13 = sbr.rel (0) target = $region13
  $region12: #{forward.1} parent=0 // pred_region
    _
  $region13: #{forward.1} parent=0 // pred_fallthru
    _
  %v15 = vld [vmem:[%s0] sm:$0xff]
  %v16 = vld [vmem:[%s0 + $0x8] sm:$0xff]
  %v17 = vld [vmem:[%s0 + $0x10] sm:$0xff]
  %v18 = vld [vmem:[%s0 + $0x18] sm:$0xff]
  %v19 = vld [vmem:[%s0 + $0x20] sm:$0xff]
  %v20 = vld [vmem:[%s0 + $0x28] sm:$0xff]
  %v21 = vld [vmem:[%s0 + $0x30] sm:$0xff]
  %v22 = vld [vmem:[%s0 + $0x38] sm:$0xff]
  %v23 = vld [vmem:[%s0 + $0x40] sm:$0xff]
  %v24 = vld [vmem:[%s0 + $0x48] sm:$0xff]
  %v25 = vld [vmem:[%s0 + $0x50] sm:$0xff]
  %v26 = vld [vmem:[%s0 + $0x58] sm:$0xff]
  %v27 = vld [vmem:[%s0 + $0x60] sm:$0xff]
  %v28 = vld [vmem:[%s0 + $0x68] sm:$0xff]
  %v29 = vld [vmem:[%s0 + $0x70] sm:$0xff]
  %v30 = vld [vmem:[%s0 + $0x78] sm:$0xff]
  %v31 = vld [vmem:[%s0 + $0x80] sm:$0xff]
  %v32 = vld [vmem:[%s0 + $0x88] sm:$0xff]
  %v33 = vld [vmem:[%s0 + $0x90] sm:$0xff]
  %v34 = vld [vmem:[%s0 + $0x98] sm:$0xff]
  %v35 = vld [vmem:[%s0 + $0xa0] sm:$0xff]
  %v36 = vld [vmem:[%s0 + $0xa8] sm:$0xff]
  %v37 = vld [vmem:[%s0 + $0xb0] sm:$0xff]
  %v38 = vld [vmem:[%s0 + $0xb8] sm:$0xff]
  %v39 = vld [vmem:[%s0 + $0xc0] sm:$0xff]
  %v40 = vld [vmem:[%s0 + $0xc8] sm:$0xff]
  %v41 = vld [vmem:[%s0 + $0xd0] sm:$0xff]
  %v42 = vld [vmem:[%s0 + $0xd8] sm:$0xff]
  %v43 = vld [vmem:[%s0 + $0xe0] sm:$0xff]
  %v44 = vld [vmem:[%s0 + $0xe8] sm:$0xff]
  %v45 = vld [vmem:[%s0 + $0xf0] sm:$0xff]
  %v46 = vld [vmem:[%s0 + $0xf8] sm:$0xff]
  %v47 = vpack.c.bf16 %v16, %v15
  %v48 = vpack.c.bf16 %v18, %v17
  %v49 = vpack.c.bf16 %v20, %v19
  %v50 = vpack.c.bf16 %v22, %v21
  %v51 = vpack.c.bf16 %v24, %v23
  %v52 = vpack.c.bf16 %v26, %v25
  %v53 = vpack.c.bf16 %v28, %v27
  %v54 = vpack.c.bf16 %v30, %v29
  %v55 = vpack.c.bf16 %v32, %v31
  %v56 = vpack.c.bf16 %v34, %v33
  %v57 = vpack.c.bf16 %v36, %v35
  %v58 = vpack.c.bf16 %v38, %v37
  %v59 = vpack.c.bf16 %v40, %v39
  %v60 = vpack.c.bf16 %v42, %v41
  %v61 = vpack.c.bf16 %v44, %v43
  %v62 = vpack.c.bf16 %v46, %v45
  %v63 = vld [vmem:[%s1] sm:$0xf]
  %v64 = vld [vmem:[%s1 + $0x4] sm:$0xf]
  %v65 = vld [vmem:[%s1 + $0x8] sm:$0xf]
  %v66 = vld [vmem:[%s1 + $0xc] sm:$0xf]
  %v67 = vld [vmem:[%s1 + $0x10] sm:$0xf]
  %v68 = vld [vmem:[%s1 + $0x14] sm:$0xf]
  %v69 = vld [vmem:[%s1 + $0x18] sm:$0xf]
  %v70 = vld [vmem:[%s1 + $0x1c] sm:$0xf]
  %v71 = vld [vmem:[%s2] sm:$0x1]
  %v73 = vlaneseq
  %v74 = vshrl.u32 %v73, 7
  %v75 = vsub.s32 0, %v74
  %v76 = vrot.slane %v71, %v75
  %v86 = vunpack.c.l.b16 %v63
  %v87 = vunpack.c.l.b16 %v64
  %v88 = vunpack.c.l.b16 %v65
  %v89 = vunpack.c.l.b16 %v66
  %v90 = vunpack.c.l.b16 %v67
  %v91 = vunpack.c.l.b16 %v68
  %v92 = vunpack.c.l.b16 %v69
  %v93 = vunpack.c.l.b16 %v70
  %v94 = vpack.c.b16 %v87, %v86
  %v95 = vpack.c.b16 %v89, %v88
  %v96 = vpack.c.b16 %v91, %v90
  %v97 = vpack.c.b16 %v93, %v92
  %vm102 = vcmask 523264
  %v104 = vsel %vm102, %v47, 0
  %v107 = vsel %vm102, %v48, 0
  %v110 = vsel %vm102, %v49, 0
  %v113 = vsel %vm102, %v50, 0
  %v116 = vsel %vm102, %v51, 0
  %v119 = vsel %vm102, %v52, 0
  %v122 = vsel %vm102, %v53, 0
  %v125 = vsel %vm102, %v54, 0
  %v128 = vsel %vm102, %v55, 0
  %v131 = vsel %vm102, %v56, 0
  %v134 = vsel %vm102, %v57, 0
  %v137 = vsel %vm102, %v58, 0
  %v140 = vsel %vm102, %v59, 0
  %v143 = vsel %vm102, %v60, 0
  %v146 = vsel %vm102, %v61, 0
  %v149 = vsel %vm102, %v62, 0
  %151 = vmatprep.subr.bf16.mxu0 0
  %152 = vmatpush1.bf16.msra.mxu0 %v94
  %153 = vmatprep.subr.bf16.mxu0 0
  %154 = vmatpush1.bf16.msra.mxu0 %v95
  %155 = vmatprep.subr.bf16.mxu0 0
  %156 = vmatpush1.bf16.msra.mxu0 %v96
  %157 = vmatprep.subr.bf16.mxu0 0
  %158 = vmatpush1.bf16.msra.mxu0 %v97
  %159 = vmatprep.subr.bf16.mxu0 0
  %160 = vmatpush1.bf16.msra.mxu0 0
  %161 = vmatprep.subr.bf16.mxu0 0
  %162 = vmatpush1.bf16.msra.mxu0 0
  %163 = vmatprep.subr.bf16.mxu0 0
  %164 = vmatpush1.bf16.msra.mxu0 0
  %165 = vmatprep.subr.bf16.mxu0 0
  %166 = vmatpush1.bf16.msra.mxu0 0
  %167 = vmatprep.subr.bf16.mxu0 0
  %168 = vmatpush1.bf16.msra.mxu0 0
  %169 = vmatprep.subr.bf16.mxu0 0
  %170 = vmatpush1.bf16.msra.mxu0 0
  %171 = vmatprep.subr.bf16.mxu0 0
  %172 = vmatpush1.bf16.msra.mxu0 0
  %173 = vmatprep.subr.bf16.mxu0 0
  %174 = vmatpush1.bf16.msra.mxu0 0
  %175 = vmatprep.subr.bf16.mxu0 0
  %176 = vmatpush1.bf16.msra.mxu0 0
  %177 = vmatprep.subr.bf16.mxu0 0
  %178 = vmatpush1.bf16.msra.mxu0 0
  %179 = vmatprep.subr.bf16.mxu0 0
  %180 = vmatpush1.bf16.msra.mxu0 0
  %181 = vmatprep.subr.bf16.mxu0 0
  %182 = vmatpush1.bf16.msra.mxu0 0
  %183 = vmatprep.mubr.bf16.mxu0 0
  %184 = vmatmul.mubr.bf16.gmra.mrb[0].mxu0 %v104
  %v185 = vpop.f32.mrb[0].mxu0
  %v186 = vadd.f32 %v76, %v185
  %v187 = vpop.f32.mrb[0].mxu0
  %v188 = vpop.f32.mrb[0].mxu0
  %v189 = vadd.f32 %v76, %v188
  %v190 = vpop.f32.mrb[0].mxu0
  %191 = vmatprep.mubr.bf16.mxu0 0
  %192 = vmatmul.mubr.bf16.gmra.mrb[0].mxu0 %v107
  %v193 = vpop.f32.mrb[0].mxu0
  %v194 = vadd.f32 %v76, %v193
  %v195 = vpop.f32.mrb[0].mxu0
  %v196 = vpop.f32.mrb[0].mxu0
  %v197 = vadd.f32 %v76, %v196
  %v198 = vpop.f32.mrb[0].mxu0
  %199 = vmatprep.mubr.bf16.mxu0 0
  %200 = vmatmul.mubr.bf16.gmra.mrb[0].mxu0 %v110
  %v201 = vpop.f32.mrb[0].mxu0
  %v202 = vadd.f32 %v76, %v201
  %v203 = vpop.f32.mrb[0].mxu0
  %v204 = vpop.f32.mrb[0].mxu0
  %v205 = vadd.f32 %v76, %v204
  %v206 = vpop.f32.mrb[0].mxu0
  %207 = vmatprep.mubr.bf16.mxu0 0
  %208 = vmatmul.mubr.bf16.gmra.mrb[0].mxu0 %v113
  %v209 = vpop.f32.mrb[0].mxu0
  %v210 = vadd.f32 %v76, %v209
  %v211 = vpop.f32.mrb[0].mxu0
  %v212 = vpop.f32.mrb[0].mxu0
  %v213 = vadd.f32 %v76, %v212
  %v214 = vpop.f32.mrb[0].mxu0
  %215 = vmatprep.mubr.bf16.mxu0 0
  %216 = vmatmul.mubr.bf16.gmra.mrb[0].mxu0 %v116
  %v217 = vpop.f32.mrb[0].mxu0
  %v218 = vadd.f32 %v76, %v217
  %v219 = vpop.f32.mrb[0].mxu0
  %v220 = vpop.f32.mrb[0].mxu0
  %v221 = vadd.f32 %v76, %v220
  %v222 = vpop.f32.mrb[0].mxu0
  %223 = vmatprep.mubr.bf16.mxu0 0
  %224 = vmatmul.mubr.bf16.gmra.mrb[0].mxu0 %v119
  %v225 = vpop.f32.mrb[0].mxu0
  %v226 = vadd.f32 %v76, %v225
  %v227 = vpop.f32.mrb[0].mxu0
  %v228 = vpop.f32.mrb[0].mxu0
  %v229 = vadd.f32 %v76, %v228
  %v230 = vpop.f32.mrb[0].mxu0
  %231 = vmatprep.mubr.bf16.mxu0 0
  %232 = vmatmul.mubr.bf16.gmra.mrb[0].mxu0 %v122
  %v233 = vpop.f32.mrb[0].mxu0
  %v234 = vadd.f32 %v76, %v233
  %v235 = vpop.f32.mrb[0].mxu0
  %v236 = vpop.f32.mrb[0].mxu0
  %v237 = vadd.f32 %v76, %v236
  %v238 = vpop.f32.mrb[0].mxu0
  %239 = vmatprep.mubr.bf16.mxu0 0
  %240 = vmatmul.mubr.bf16.gmra.mrb[0].mxu0 %v125
  %v241 = vpop.f32.mrb[0].mxu0
  %v242 = vadd.f32 %v76, %v241
  %v243 = vpop.f32.mrb[0].mxu0
  %v244 = vpop.f32.mrb[0].mxu0
  %v245 = vadd.f32 %v76, %v244
  %v246 = vpop.f32.mrb[0].mxu0
  %247 = vmatprep.mubr.bf16.mxu0 0
  %248 = vmatmul.mubr.bf16.gmra.mrb[0].mxu0 %v128
  %v249 = vpop.f32.mrb[0].mxu0
  %v250 = vadd.f32 %v76, %v249
  %v251 = vpop.f32.mrb[0].mxu0
  %v252 = vpop.f32.mrb[0].mxu0
  %v253 = vadd.f32 %v76, %v252
  %v254 = vpop.f32.mrb[0].mxu0
  %255 = vmatprep.mubr.bf16.mxu0 0
  %256 = vmatmul.mubr.bf16.gmra.mrb[0].mxu0 %v131
  %v257 = vpop.f32.mrb[0].mxu0
  %v258 = vadd.f32 %v76, %v257
  %v259 = vpop.f32.mrb[0].mxu0
  %v260 = vpop.f32.mrb[0].mxu0
  %v261 = vadd.f32 %v76, %v260
  %v262 = vpop.f32.mrb[0].mxu0
  %263 = vmatprep.mubr.bf16.mxu0 0
  %264 = vmatmul.mubr.bf16.gmra.mrb[0].mxu0 %v134
  %v265 = vpop.f32.mrb[0].mxu0
  %v266 = vadd.f32 %v76, %v265
  %v267 = vpop.f32.mrb[0].mxu0
  %v268 = vpop.f32.mrb[0].mxu0
  %v269 = vadd.f32 %v76, %v268
  %v270 = vpop.f32.mrb[0].mxu0
  %271 = vmatprep.mubr.bf16.mxu0 0
  %272 = vmatmul.mubr.bf16.gmra.mrb[0].mxu0 %v137
  %v273 = vpop.f32.mrb[0].mxu0
  %v274 = vadd.f32 %v76, %v273
  %v275 = vpop.f32.mrb[0].mxu0
  %v276 = vpop.f32.mrb[0].mxu0
  %v277 = vadd.f32 %v76, %v276
  %v278 = vpop.f32.mrb[0].mxu0
  %279 = vmatprep.mubr.bf16.mxu0 0
  %280 = vmatmul.mubr.bf16.gmra.mrb[0].mxu0 %v140
  %v281 = vpop.f32.mrb[0].mxu0
  %v282 = vadd.f32 %v76, %v281
  %v283 = vpop.f32.mrb[0].mxu0
  %v284 = vpop.f32.mrb[0].mxu0
  %v285 = vadd.f32 %v76, %v284
  %v286 = vpop.f32.mrb[0].mxu0
  %287 = vmatprep.mubr.bf16.mxu0 0
  %288 = vmatmul.mubr.bf16.gmra.mrb[0].mxu0 %v143
  %v289 = vpop.f32.mrb[0].mxu0
  %v290 = vadd.f32 %v76, %v289
  %v291 = vpop.f32.mrb[0].mxu0
  %v292 = vpop.f32.mrb[0].mxu0
  %v293 = vadd.f32 %v76, %v292
  %v294 = vpop.f32.mrb[0].mxu0
  %295 = vmatprep.mubr.bf16.mxu0 0
  %296 = vmatmul.mubr.bf16.gmra.mrb[0].mxu0 %v146
  %v297 = vpop.f32.mrb[0].mxu0
  %v298 = vadd.f32 %v76, %v297
  %v299 = vpop.f32.mrb[0].mxu0
  %v300 = vpop.f32.mrb[0].mxu0
  %v301 = vadd.f32 %v76, %v300
  %v302 = vpop.f32.mrb[0].mxu0
  %303 = vmatprep.mubr.bf16.mxu0 0
  %304 = vmatmul.mubr.bf16.gmra.mrb[0].mxu0 %v149
  %v305 = vpop.f32.mrb[0].mxu0
  %v306 = vadd.f32 %v76, %v305
  %v307 = vpop.f32.mrb[0].mxu0
  %v308 = vpop.f32.mrb[0].mxu0
  %v309 = vadd.f32 %v76, %v308
  %v310 = vpop.f32.mrb[0].mxu0
  %311 = vdwg.mxu0
  %312 = vst [vmem:[%s3] sm:$0xff] %v186
  %313 = vst [vmem:[%s3 + $0x8] sm:$0xff] %v189
  %314 = vst [vmem:[%s3 + $0x10] sm:$0xff] %v194
  %315 = vst [vmem:[%s3 + $0x18] sm:$0xff] %v197
  %316 = vst [vmem:[%s3 + $0x20] sm:$0xff] %v202
  %317 = vst [vmem:[%s3 + $0x28] sm:$0xff] %v205
  %318 = vst [vmem:[%s3 + $0x30] sm:$0xff] %v210
  %319 = vst [vmem:[%s3 + $0x38] sm:$0xff] %v213
  %320 = vst [vmem:[%s3 + $0x40] sm:$0xff] %v218
  %321 = vst [vmem:[%s3 + $0x48] sm:$0xff] %v221
  %322 = vst [vmem:[%s3 + $0x50] sm:$0xff] %v226
  %323 = vst [vmem:[%s3 + $0x58] sm:$0xff] %v229
  %324 = vst [vmem:[%s3 + $0x60] sm:$0xff] %v234
  %325 = vst [vmem:[%s3 + $0x68] sm:$0xff] %v237
  %326 = vst [vmem:[%s3 + $0x70] sm:$0xff] %v242
  %327 = vst [vmem:[%s3 + $0x78] sm:$0xff] %v245
  %328 = vst [vmem:[%s3 + $0x80] sm:$0xff] %v250
  %329 = vst [vmem:[%s3 + $0x88] sm:$0xff] %v253
  %330 = vst [vmem:[%s3 + $0x90] sm:$0xff] %v258
  %331 = vst [vmem:[%s3 + $0x98] sm:$0xff] %v261
  %332 = vst [vmem:[%s3 + $0xa0] sm:$0xff] %v266
  %333 = vst [vmem:[%s3 + $0xa8] sm:$0xff] %v269
  %334 = vst [vmem:[%s3 + $0xb0] sm:$0xff] %v274
  %335 = vst [vmem:[%s3 + $0xb8] sm:$0xff] %v277
  %336 = vst [vmem:[%s3 + $0xc0] sm:$0xff] %v282
  %337 = vst [vmem:[%s3 + $0xc8] sm:$0xff] %v285
  %338 = vst [vmem:[%s3 + $0xd0] sm:$0xff] %v290
  %339 = vst [vmem:[%s3 + $0xd8] sm:$0xff] %v293
  %340 = vst [vmem:[%s3 + $0xe0] sm:$0xff] %v298
  %341 = vst [vmem:[%s3 + $0xe8] sm:$0xff] %v301
  %342 = vst [vmem:[%s3 + $0xf0] sm:$0xff] %v306
  %343 = vst [vmem:[%s3 + $0xf8] sm:$0xff] %v309
  // Predicated region
  $region14: #{forward.1} parent=0 // pred_check
    _
  $region15: #{forward.1} parent=0 // pred_check_branch
    %345 = sbr.rel (0) target = $region17
  $region16: #{forward.1} parent=0 // pred_region
    _
  $region17: #{forward.1} parent=0 // pred_fallthru
    _
  // Predicated region
  $region18: #{forward.1} parent=0 // pred_check
    _
  $region19: #{forward.1} parent=0 // pred_check_branch
    %347 = sbr.rel (0) target = $region21
  $region20: #{forward.1} parent=0 // pred_region
    _
  $region21: #{forward.1} parent=0 // pred_fallthru
    _

</llo_original>
